<compile_context>
chip_gen: v7x
topology: tpu7x:2x2x1
jax: 0.10.0
libtpu: 0.0.40
codegen_flags: <defaults>
</compile_context>

<pallas_src>
import jax
import jax.numpy as jnp
from jax.experimental import pallas as pl
from jax.experimental.pallas import tpu as pltpu


def _round_up(x, m):
    return (x + m - 1) // m * m


# --------------------------------------------------------------------------------------
# Kernel
# --------------------------------------------------------------------------------------
def fnn_kernel(x_ref, w1_ref, b1_ref, w2_ref, b2_ref, out_ref, t_ref, m_ref, l_ref):
    # x_ref:  [bm, D]          bf16 batch tile (resident across the vocab axis)
    # w1_ref: [D, nhid_p]      bf16 (grid-constant)    b1_ref: [1, nhid_p] f32
    # w2_ref: [nhid_p, tn]     bf16 vocab tile         b2_ref: [1, tn]     f32
    # out_ref:[bm, ntok_p]     f32 log-probs, resident across the vocab axis
    # t_ref:  [bm, nhid_p]     bf16 cached tanh activations
    # m_ref/l_ref: [bm, 1]     f32 online logsumexp state
    j = pl.program_id(1)
    nj = pl.num_programs(1)
    tn = w2_ref.shape[1]

    @pl.when(j == 0)
    def _():
        # hidden = tanh(x @ w1 + b1): computed once per batch tile, cached in VMEM.
        h = jnp.dot(x_ref[...], w1_ref[...], preferred_element_type=jnp.float32)
        h = h + b1_ref[...]
        t_ref[...] = jnp.tanh(h).astype(t_ref.dtype)
        m_ref[...] = jnp.full(m_ref.shape, -jnp.inf, dtype=m_ref.dtype)
        l_ref[...] = jnp.zeros(l_ref.shape, dtype=l_ref.dtype)

    # decoder tile: [bm, tn] logits, bf16 MXU pass with f32 accumulation.
    logits = jnp.dot(t_ref[...], w2_ref[...], preferred_element_type=jnp.float32)
    logits = logits + b2_ref[...]

    # online logsumexp statistics over the vocab axis.
    m_prev = m_ref[...]
    m_new = jnp.maximum(m_prev, jnp.max(logits, axis=-1, keepdims=True))
    alpha = jnp.exp(m_prev - m_new)
    l_ref[...] = alpha * l_ref[...] + jnp.sum(jnp.exp(logits - m_new),
                                              axis=-1, keepdims=True)
    m_ref[...] = m_new

    # stash raw logits into the batch-resident output block (lane-aligned dynamic slice).
    col = pl.multiple_of(j * tn, 128)
    out_ref[:, pl.ds(col, tn)] = logits.astype(out_ref.dtype)

    @pl.when(j == nj - 1)
    def _():
        # finalize: log_softmax = logits - (max + log(sum exp(logits - max)))
        lse = m_ref[...] + jnp.log(l_ref[...])
        out_ref[...] = (out_ref[...] - lse).astype(out_ref.dtype)


# --------------------------------------------------------------------------------------
# One-time parameter preparation (hoisted out of the per-call forward)
# --------------------------------------------------------------------------------------
def prepare_params(enc, w1, b1, w2, b2, *, vocab_block=2048):
    """Pad to lane-dense shapes and cast matmul operands to bf16 ONCE."""
    ntoken, _ = enc.shape
    _, nhid = w1.shape
    vocab_block = _round_up(max(int(vocab_block), 128), 128)

    nhid_p = _round_up(nhid, 128)
    tn = min(vocab_block, _round_up(ntoken, 128))
    ntok_p = _round_up(ntoken, tn)

    # Zero-padded hidden units are exact: zero w1 cols + zero b1 -> tanh(0)=0 -> zero w2 rows.
    w1p = jnp.pad(w1, ((0, 0), (0, nhid_p - nhid))).astype(jnp.bfloat16)
    b1p = jnp.pad(b1, ((0, 0), (0, nhid_p - nhid))).astype(jnp.float32)
    w2p = jnp.pad(w2, ((0, nhid_p - nhid), (0, ntok_p - ntoken))).astype(jnp.bfloat16)
    # Padded vocab columns get a hugely negative bias (f32) -> exp underflows to 0, so the
    # log-softmax over real columns is unchanged.
    b2p = jnp.pad(b2, ((0, 0), (0, ntok_p - ntoken)),
                  constant_values=-1e30).astype(jnp.float32)

    return dict(enc=enc.astype(jnp.bfloat16), w1=w1p, b1=b1p, w2=w2p, b2=b2p,
                ntoken=ntoken, nhid=nhid, nhid_p=nhid_p, ntok_p=ntok_p, tn=tn)


# --------------------------------------------------------------------------------------
# Tiling / VMEM heuristics
# --------------------------------------------------------------------------------------
def _pick_bm(B, ntok_p, block_b):
    if B <= 16:
        bm = _round_up(max(B, 1), 8)
    else:
        # >=2 batch tiles so the "parallel" axis can shard across v7x's 2 TensorCores;
        # multiples of 16 for bf16 sublane packing.
        bm = min(block_b, _round_up((B + 1) // 2, 16))
    # Keep the batch-resident f32 output block (double-buffered) within ~24 MiB.
    cap = (24 << 20) // (2 * 4 * ntok_p)
    cap = max(8, (cap // 8) * 8)
    return max(8, min(bm, cap))


def _vmem_limit_bytes(bm, D, nhid_p, tn, ntok_p):
    f = 2 * bm * D * 2            # x tile (bf16, double-buffered)
    f += 2 * D * nhid_p * 2       # w1 (bf16, double-buffered)
    f += 2 * nhid_p * 4           # b1 (f32)
    f += 2 * nhid_p * tn * 2      # w2 vocab tile (bf16, double-buffered)
    f += 2 * tn * 4               # b2 vocab tile (f32)
    f += 2 * bm * ntok_p * 4      # batch-resident f32 output block (double-buffered)
    f += bm * nhid_p * 2          # cached tanh activations (bf16 scratch)
    f += 2 * bm * 4 * 2           # m/l scratch
    try:
        cap = int(pltpu.get_tpu_info().vmem_capacity_bytes)
    except Exception:  # fall back to the smallest current generation (v7x: 64 MiB/TC)
        cap = 64 * 1024 * 1024
    return int(min(max(f + (8 << 20), 32 << 20), (cap * 3) // 4))


# --------------------------------------------------------------------------------------
# Forward
# --------------------------------------------------------------------------------------
def fnn_forward(tokens, params, *, seq_size, emsize, block_b=128):
    """tokens: [B, seq] int32.  params: output of prepare_params.
    Returns [B, ntoken] log-probs (f32)."""
    enc, w1, b1, w2, b2 = params["enc"], params["w1"], params["b1"], params["w2"], params["b2"]
    ntoken, nhid_p = params["ntoken"], params["nhid_p"]
    ntok_p, tn = params["ntok_p"], params["tn"]

    B = tokens.shape[0]
    D = seq_size * emsize
    assert w1.shape[0] == D, "w1 must be [seq_size*emsize, nhid_p]"

    # Embedding gather (plain-JAX glue). enc is already bf16 -> gathered activation is bf16,
    # no extra elementwise cast pass over [B, seq, emsize].
    x = jnp.take(enc, tokens, axis=0).reshape(B, D)

    bm = _pick_bm(B, ntok_p, block_b)
    B_pad = _round_up(B, bm)
    if B_pad != B:
        x = jnp.pad(x, ((0, B_pad - B), (0, 0)))

    grid = (B_pad // bm, ntok_p // tn)
    vmem_limit = _vmem_limit_bytes(bm, D, nhid_p, tn, ntok_p)

    out = pl.pallas_call(
        fnn_kernel,
        out_shape=jax.ShapeDtypeStruct((B_pad, ntok_p), jnp.float32),
        grid_spec=pltpu.PrefetchScalarGridSpec(
            num_scalar_prefetch=0,
            grid=grid,
            in_specs=[
                pl.BlockSpec((bm, D), lambda i, j: (i, 0)),         # x (per batch tile)
                pl.BlockSpec((D, nhid_p), lambda i, j: (0, 0)),     # w1 (grid-constant)
                pl.BlockSpec((1, nhid_p), lambda i, j: (0, 0)),     # b1 (grid-constant)
                pl.BlockSpec((nhid_p, tn), lambda i, j: (0, j)),    # w2 (vocab-streamed)
                pl.BlockSpec((1, tn), lambda i, j: (0, j)),         # b2 (vocab-streamed)
            ],
            # Output block is resident across the vocab axis (accumulator pattern).
            out_specs=pl.BlockSpec((bm, ntok_p), lambda i, j: (i, 0)),
            scratch_shapes=[
                pltpu.VMEM((bm, nhid_p), jnp.bfloat16),  # cached tanh activations
                pltpu.VMEM((bm, 1), jnp.float32),        # running max
                pltpu.VMEM((bm, 1), jnp.float32),        # running sum-exp
            ],
        ),
        compiler_params=pltpu.CompilerParams(
            dimension_semantics=("parallel", "arbitrary"),
            vmem_limit_bytes=vmem_limit,
        ),
    )(x, w1, b1, w2, b2)

    # Strip batch / vocab padding.
    return out[:B, :ntoken]


# --------------------------------------------------------------------------------------
# Init + reference
# --------------------------------------------------------------------------------------
def init_params(key, seq_size, ntoken, emsize, nhid):
    """Deterministic init matching FNNModel.__init__/init_weights shapes.
    Weights ~ U(-0.1, 0.1); biases use the default nn.Linear U(-1/sqrt(fan_in), ...).
    Linear weights are stored transposed ([in, out]) for the kernel."""
    initrange = 0.1
    k_enc, k_w1, k_b1, k_w2, k_b2 = jax.random.split(key, 5)
    enc = jax.random.uniform(k_enc, (ntoken, emsize), jnp.float32, -initrange, initrange)
    D = seq_size * emsize
    w1 = jax.random.uniform(k_w1, (D, nhid), jnp.float32, -initrange, initrange)
    b1 = jax.random.uniform(k_b1, (1, nhid), jnp.float32,
                            -1.0 / (D ** 0.5), 1.0 / (D ** 0.5))
    w2 = jax.random.uniform(k_w2, (nhid, ntoken), jnp.float32, -initrange, initrange)
    b2 = jax.random.uniform(k_b2, (1, ntoken), jnp.float32,
                            -1.0 / (nhid ** 0.5), 1.0 / (nhid ** 0.5))
    return enc, w1, b1, w2, b2


def _reference_forward(tokens, enc, w1, b1, w2, b2, *, seq_size, emsize):
    """Pure-JAX f32 reference (matches the PyTorch module's forward)."""
    B = tokens.shape[0]
    x = jnp.take(enc, tokens, axis=0).reshape(B, seq_size * emsize)
    h = jnp.tanh(x @ w1 + b1)
    logits = h @ w2 + b2
    return jax.nn.log_softmax(logits, axis=-1)


# --------------------------------------------------------------------------------------
if __name__ == "__main__":
    key = jax.random.PRNGKey(0)
    k1_params, k1_tok, k2_params, k2_tok = jax.random.split(key, 4)

    # Config 1: small shapes consistent with the module (single vocab tile, tiny batch).
    seq_size, ntoken, emsize, nhid = 8, 128, 32, 32
    B = 2
    enc, w1, b1, w2, b2 = init_params(k1_params, seq_size, ntoken, emsize, nhid)
    params = prepare_params(enc, w1, b1, w2, b2)                    # one-time prep
    tokens = jax.random.randint(k1_tok, (B, seq_size), 0, ntoken, dtype=jnp.int32)

    logp = jax.block_until_ready(
        fnn_forward(tokens, params, seq_size=seq_size, emsize=emsize))
    assert logp.shape == (B, ntoken)
    assert bool(jnp.all(jnp.abs(jnp.exp(logp).sum(axis=1) - 1.0) < 1e-3))
    ref = _reference_forward(tokens, enc, w1, b1, w2, b2,
                             seq_size=seq_size, emsize=emsize)
    assert bool(jnp.all(jnp.abs(logp - ref) < 2e-2))

    # Config 2: exercises the vocab-tiled online log-softmax (3 vocab tiles) and the
    # multi-batch-tile path (2 batch tiles), with non-multiple-of-128 vocab padding.
    seq2, ntok2, em2, nhid2 = 4, 300, 16, 48
    B2 = 20
    enc2, w12, b12, w22, b22 = init_params(k2_params, seq2, ntok2, em2, nhid2)
    params2 = prepare_params(enc2, w12, b12, w22, b22, vocab_block=128)
    tok2 = jax.random.randint(k2_tok, (B2, seq2), 0, ntok2, dtype=jnp.int32)

    logp2 = jax.block_until_ready(
        fnn_forward(tok2, params2, seq_size=seq2, emsize=em2))
    assert logp2.shape == (B2, ntok2)
    assert bool(jnp.all(jnp.abs(jnp.exp(logp2).sum(axis=1) - 1.0) < 1e-3))
    ref2 = _reference_forward(tok2, enc2, w12, b12, w22, b22,
                              seq_size=seq2, emsize=em2)
    assert bool(jnp.all(jnp.abs(logp2 - ref2) < 2e-2))

    print("KERNEL_OK")
</pallas_src>

<mosaic_0001>
module attributes {stable_mosaic.version = 11 : i64} {
  func.func @fnn_kernel(%arg0: i32, %arg1: i32, %arg2: memref<8x256xbf16, #tpu.memory_space<vmem>>, %arg3: memref<256x128xbf16, #tpu.memory_space<vmem>>, %arg4: memref<1x128xf32, #tpu.memory_space<vmem>>, %arg5: memref<128x128xbf16, #tpu.memory_space<vmem>>, %arg6: memref<1x128xf32, #tpu.memory_space<vmem>>, %arg7: memref<8x128xf32, #tpu.memory_space<vmem>>, %arg8: memref<8x128xbf16, #tpu.memory_space<vmem>>, %arg9: memref<8x1xf32, #tpu.memory_space<vmem>>, %arg10: memref<8x1xf32, #tpu.memory_space<vmem>>) attributes {dimension_semantics = [#tpu.dimension_semantics<parallel>, #tpu.dimension_semantics<arbitrary>], iteration_bounds = array<i64: 1, 1>, scalar_prefetch = 0 : i64, scratch_operands = 3 : i64, tpu.core_type = #tpu.core_type<tc>, window_params = [{transform_indices = @transform_0, window_bounds = array<i64: 8, 256>}, {pipeline_mode = #tpu.pipeline_mode<synchronous>, transform_indices = @transform_1, window_bounds = array<i64: 256, 128>}, {pipeline_mode = #tpu.pipeline_mode<synchronous>, transform_indices = @transform_2, window_bounds = array<i64: 1, 128>}, {transform_indices = @transform_3, window_bounds = array<i64: 128, 128>}, {transform_indices = @transform_4, window_bounds = array<i64: 1, 128>}, {transform_indices = @transform_5, window_bounds = array<i64: 8, 128>}]} {
    %c0_i32 = arith.constant 0 : i32
    %0 = arith.cmpi eq, %arg1, %c0_i32 : i32
    %1 = arith.extui %0 : i1 to i32
    %c0_i32_0 = arith.constant 0 : i32
    %2 = arith.cmpi ne, %1, %c0_i32_0 : i32
    scf.if %2 {
      %c0_19 = arith.constant 0 : index
      %c0_20 = arith.constant 0 : index
      %32 = vector.load %arg2[%c0_19, %c0_20] : memref<8x256xbf16, #tpu.memory_space<vmem>>, vector<8x256xbf16>
      %c0_21 = arith.constant 0 : index
      %c0_22 = arith.constant 0 : index
      %33 = vector.load %arg3[%c0_21, %c0_22] : memref<256x128xbf16, #tpu.memory_space<vmem>>, vector<256x128xbf16>
      %cst_23 = arith.constant dense<0.000000e+00> : vector<8x128xf32>
      %34 = tpu.matmul %32, %33, %cst_23 {dimension_numbers = #tpu.dot_dimension_numbers<[1], [0], [0], [1], [0, 0, 1, 1], [], []>} : vector<8x256xbf16>, vector<256x128xbf16>, vector<8x128xf32> -> vector<8x128xf32>
      %c0_24 = arith.constant 0 : index
      %c0_25 = arith.constant 0 : index
      %35 = vector.load %arg4[%c0_24, %c0_25] : memref<1x128xf32, #tpu.memory_space<vmem>>, vector<1x128xf32>
      %36 = vector.broadcast %35 : vector<1x128xf32> to vector<8x128xf32>
      %37 = arith.addf %34, %36 : vector<8x128xf32>
      %38 = math.tanh %37 : vector<8x128xf32>
      %39 = arith.truncf %38 : vector<8x128xf32> to vector<8x128xbf16>
      %c0_26 = arith.constant 0 : index
      %c0_27 = arith.constant 0 : index
      %40 = vector.load %arg8[%c0_26, %c0_27] : memref<8x128xbf16, #tpu.memory_space<vmem>>, vector<8x128xbf16>
      tpu.vector_store %arg8[%c0_26, %c0_27], %39 {strides = array<i32>} : memref<8x128xbf16, #tpu.memory_space<vmem>>, vector<8x128xbf16>,
      %cst_28 = arith.constant 0xFF800000 : f32
      %41 = vector.broadcast %cst_28 : f32 to vector<8x1xf32>
      %c0_29 = arith.constant 0 : index
      %c0_30 = arith.constant 0 : index
      %42 = vector.load %arg9[%c0_29, %c0_30] : memref<8x1xf32, #tpu.memory_space<vmem>>, vector<8x1xf32>
      tpu.vector_store %arg9[%c0_29, %c0_30], %41 {strides = array<i32>} : memref<8x1xf32, #tpu.memory_space<vmem>>, vector<8x1xf32>,
      %cst_31 = arith.constant 0.000000e+00 : f32
      %43 = vector.broadcast %cst_31 : f32 to vector<8x1xf32>
      %c0_32 = arith.constant 0 : index
      %c0_33 = arith.constant 0 : index
      %44 = vector.load %arg10[%c0_32, %c0_33] : memref<8x1xf32, #tpu.memory_space<vmem>>, vector<8x1xf32>
      tpu.vector_store %arg10[%c0_32, %c0_33], %43 {strides = array<i32>} : memref<8x1xf32, #tpu.memory_space<vmem>>, vector<8x1xf32>,
    } else {
    }
    %c0 = arith.constant 0 : index
    %c0_1 = arith.constant 0 : index
    %3 = vector.load %arg8[%c0, %c0_1] : memref<8x128xbf16, #tpu.memory_space<vmem>>, vector<8x128xbf16>
    %c0_2 = arith.constant 0 : index
    %c0_3 = arith.constant 0 : index
    %4 = vector.load %arg5[%c0_2, %c0_3] : memref<128x128xbf16, #tpu.memory_space<vmem>>, vector<128x128xbf16>
    %cst = arith.constant dense<0.000000e+00> : vector<8x128xf32>
    %5 = tpu.matmul %3, %4, %cst {dimension_numbers = #tpu.dot_dimension_numbers<[1], [0], [0], [1], [0, 0, 1, 1], [], []>} : vector<8x128xbf16>, vector<128x128xbf16>, vector<8x128xf32> -> vector<8x128xf32>
    %c0_4 = arith.constant 0 : index
    %c0_5 = arith.constant 0 : index
    %6 = vector.load %arg6[%c0_4, %c0_5] : memref<1x128xf32, #tpu.memory_space<vmem>>, vector<1x128xf32>
    %7 = vector.broadcast %6 : vector<1x128xf32> to vector<8x128xf32>
    %8 = arith.addf %5, %7 : vector<8x128xf32>
    %c0_6 = arith.constant 0 : index
    %c0_7 = arith.constant 0 : index
    %9 = vector.load %arg9[%c0_6, %c0_7] : memref<8x1xf32, #tpu.memory_space<vmem>>, vector<8x1xf32>
    %cst_8 = arith.constant dense<0xFF800000> : vector<8xf32>
    %10 = vector.multi_reduction <maximumf>, %8, %cst_8 [1] : vector<8x128xf32> to vector<8xf32>
    %11 = vector.shape_cast %10 : vector<8xf32> to vector<8x1xf32>
    %12 = arith.maximumf %9, %11 : vector<8x1xf32>
    %13 = arith.subf %9, %12 : vector<8x1xf32>
    %14 = math.exp %13 : vector<8x1xf32>
    %c0_9 = arith.constant 0 : index
    %c0_10 = arith.constant 0 : index
    %15 = vector.load %arg10[%c0_9, %c0_10] : memref<8x1xf32, #tpu.memory_space<vmem>>, vector<8x1xf32>
    %16 = arith.mulf %14, %15 : vector<8x1xf32>
    %17 = vector.broadcast %12 : vector<8x1xf32> to vector<8x128xf32>
    %18 = arith.subf %8, %17 : vector<8x128xf32>
    %19 = math.exp %18 : vector<8x128xf32>
    %cst_11 = arith.constant dense<0.000000e+00> : vector<8xf32>
    %20 = vector.multi_reduction <add>, %19, %cst_11 [1] : vector<8x128xf32> to vector<8xf32>
    %21 = vector.shape_cast %20 : vector<8xf32> to vector<8x1xf32>
    %22 = arith.addf %16, %21 : vector<8x1xf32>
    %c0_12 = arith.constant 0 : index
    %c0_13 = arith.constant 0 : index
    %23 = vector.load %arg10[%c0_12, %c0_13] : memref<8x1xf32, #tpu.memory_space<vmem>>, vector<8x1xf32>
    tpu.vector_store %arg10[%c0_12, %c0_13], %22 {strides = array<i32>} : memref<8x1xf32, #tpu.memory_space<vmem>>, vector<8x1xf32>,
    %c0_14 = arith.constant 0 : index
    %c0_15 = arith.constant 0 : index
    %24 = vector.load %arg9[%c0_14, %c0_15] : memref<8x1xf32, #tpu.memory_space<vmem>>, vector<8x1xf32>
    tpu.vector_store %arg9[%c0_14, %c0_15], %12 {strides = array<i32>} : memref<8x1xf32, #tpu.memory_space<vmem>>, vector<8x1xf32>,
    %c128_i32 = arith.constant 128 : i32
    %25 = arith.muli %arg1, %c128_i32 : i32
    %26 = tpu.assume_multiple %25, 128 : i32
    %c0_16 = arith.constant 0 : index
    %27 = arith.index_cast %26 : i32 to index
    %28 = vector.load %arg7[%c0_16, %27] : memref<8x128xf32, #tpu.memory_space<vmem>>, vector<8x128xf32>
    tpu.vector_store %arg7[%c0_16, %27], %8 {strides = array<i32>} : memref<8x128xf32, #tpu.memory_space<vmem>>, vector<8x128xf32>,
    %c0_i32_17 = arith.constant 0 : i32
    %29 = arith.cmpi eq, %arg1, %c0_i32_17 : i32
    %30 = arith.extui %29 : i1 to i32
    %c0_i32_18 = arith.constant 0 : i32
    %31 = arith.cmpi ne, %30, %c0_i32_18 : i32
    scf.if %31 {
      %c0_19 = arith.constant 0 : index
      %c0_20 = arith.constant 0 : index
      %32 = vector.load %arg9[%c0_19, %c0_20] : memref<8x1xf32, #tpu.memory_space<vmem>>, vector<8x1xf32>
      %c0_21 = arith.constant 0 : index
      %c0_22 = arith.constant 0 : index
      %33 = vector.load %arg10[%c0_21, %c0_22] : memref<8x1xf32, #tpu.memory_space<vmem>>, vector<8x1xf32>
      %34 = math.log %33 : vector<8x1xf32>
      %35 = arith.addf %32, %34 : vector<8x1xf32>
      %c0_23 = arith.constant 0 : index
      %c0_24 = arith.constant 0 : index
      %36 = vector.load %arg7[%c0_23, %c0_24] : memref<8x128xf32, #tpu.memory_space<vmem>>, vector<8x128xf32>
      %37 = vector.broadcast %35 : vector<8x1xf32> to vector<8x128xf32>
      %38 = arith.subf %36, %37 : vector<8x128xf32>
      %c0_25 = arith.constant 0 : index
      %c0_26 = arith.constant 0 : index
      %39 = vector.load %arg7[%c0_25, %c0_26] : memref<8x128xf32, #tpu.memory_space<vmem>>, vector<8x128xf32>
      tpu.vector_store %arg7[%c0_25, %c0_26], %38 {strides = array<i32>} : memref<8x128xf32, #tpu.memory_space<vmem>>, vector<8x128xf32>,
    } else {
    }
    return
  }
  func.func @transform_0(%arg0: i32, %arg1: i32) -> (i32, i32) {
    %c0_i32 = arith.constant 0 : i32
    %c0_i32_0 = arith.constant 0 : i32
    return %arg0, %c0_i32 : i32, i32
  }
  func.func @transform_1(%arg0: i32, %arg1: i32) -> (i32, i32) {
    %c0_i32 = arith.constant 0 : i32
    %c0_i32_0 = arith.constant 0 : i32
    %c0_i32_1 = arith.constant 0 : i32
    return %c0_i32, %c0_i32_0 : i32, i32
  }
  func.func @transform_2(%arg0: i32, %arg1: i32) -> (i32, i32) {
    %c0_i32 = arith.constant 0 : i32
    %c0_i32_0 = arith.constant 0 : i32
    %c0_i32_1 = arith.constant 0 : i32
    return %c0_i32, %c0_i32_0 : i32, i32
  }
  func.func @transform_3(%arg0: i32, %arg1: i32) -> (i32, i32) {
    %c0_i32 = arith.constant 0 : i32
    %c0_i32_0 = arith.constant 0 : i32
    return %c0_i32, %arg1 : i32, i32
  }
  func.func @transform_4(%arg0: i32, %arg1: i32) -> (i32, i32) {
    %c0_i32 = arith.constant 0 : i32
    %c0_i32_0 = arith.constant 0 : i32
    return %c0_i32, %arg1 : i32, i32
  }
  func.func @transform_5(%arg0: i32, %arg1: i32) -> (i32, i32) {
    %c0_i32 = arith.constant 0 : i32
    %c0_i32_0 = arith.constant 0 : i32
    return %arg0, %c0_i32 : i32, i32
  }
}

</mosaic_0001>

<llo_original>
// kernel: tpu_custom_call.1
$region0: #{tpu_custom_call.1}
  #allocation0 [shape = 'u32[]', space=smem, size = 0x4, offset = 0x4, fixed_abs, tag = 'smem constant byte address 0x4 - core index']
  #allocation1 [shape = 'u32[144,128]{1,0:T(1,128)}', space=vmem, size = 0x12000, scoped, tag = 'internal scratch']
  #allocation2 [shape = 'bf16[8,128]{1,0:T(8,128)(2,1)}', space=vmem, size = 0x800, scoped, tag = 'scratch operand']
  #allocation3 [shape = 'f32[8,1]{1,0:T(8,128)}', space=vmem, size = 0x1000, scoped, tag = 'scratch operand']
  #allocation4 [shape = 'f32[8,1]{1,0:T(8,128)}', space=vmem, size = 0x1000, scoped, tag = 'scratch operand']
  %s0 = inlined_call_operand.hbm [shape: bf16[8,256], index: 0, kind: input, shape index: {}]
  %s1 = inlined_call_operand.hbm [shape: bf16[256,128], index: 1, kind: input, shape index: {}]
  %s2 = inlined_call_operand.vmem [shape: f32[1,128], index: 2, kind: input, shape index: {}]
  %s3 = inlined_call_operand.hbm [shape: bf16[128,128], index: 3, kind: input, shape index: {}]
  %s4 = inlined_call_operand.vmem [shape: f32[1,128], index: 4, kind: input, shape index: {}]
  %s5 = inlined_call_operand.hbm [shape: f32[8,128], index: 5, kind: output, shape index: {}]
  %s6 = sld [smem:[#allocation0]]
  $region50: #{tpu_custom_call.1} parent=0
    _
  %s8 = ssub.s32 1, %s6
  %s9 = scalar_select 0, %s8, %s6
  $region1: #{tpu_custom_call.1} parent=0
    #allocation5 [shape = 'u8[4096]{0}', space=vmem, size = 0x1000, scoped, tag = 'input window, operand 0, single buffered']
    #allocation6 [shape = 's32[1]{0}', space=sflag, size = 0x4, scoped, tag = 'scoped memory for tpu_custom_call.1']
    #allocation7 [shape = 's32[1]{0}', space=sflag, size = 0x4, scoped, tag = 'scoped memory for tpu_custom_call.1']
    #allocation8 [shape = 'u8[65536]{0}', space=vmem, size = 0x10000, scoped, tag = 'input window, operand 1, single buffered']
    #allocation9 [shape = 's32[1]{0}', space=sflag, size = 0x4, scoped, tag = 'scoped memory for tpu_custom_call.1']
    #allocation10 [shape = 'u8[32768]{0}', space=vmem, size = 0x8000, scoped, tag = 'input window, operand 3, single buffered']
    #allocation11 [shape = 'u8[4096]{0}', space=vmem, size = 0x1000, scoped, tag = 'output window, operand 0, single buffered']
    %10 = vsyncpa [#allocation6], 0
    %11 = vsyncpa [#allocation9], 0
    %12 = vsyncpa [#allocation7], 0
    // Predicated region
    $region2: #{tpu_custom_call.1} parent=1 // pred_check
      _
    $region3: #{tpu_custom_call.1} parent=1 // pred_check_branch
      %14 = sbr.rel (0) target = $region5
    $region4: #{tpu_custom_call.1} parent=1 // pred_region
      %s16 = ssub.s32 128, 128
      %17 = vsyncadd [#allocation6], %s16
      %s19 = sshll.u32 [#allocation5], 4
      %s20 = int_to_ptr.vmem [resolvable:$true] %s19
      %22 = dma.hbm_to_vmem [thread:$0]  %s0, 128, %s20, [#allocation6]
    $region5: #{tpu_custom_call.1} parent=1 // pred_fallthru
      _
    // Predicated region
    $region6: #{tpu_custom_call.1} parent=1 // pred_check
      _
    $region7: #{tpu_custom_call.1} parent=1 // pred_check_branch
      %24 = sbr.rel (0) target = $region9
    $region8: #{tpu_custom_call.1} parent=1 // pred_region
      %s26 = ssub.s32 2048, 2048
      %27 = vsyncadd [#allocation9], %s26
      %s28 = sshll.u32 [#allocation8], 4
      %s29 = int_to_ptr.vmem [resolvable:$true] %s28
      %34 = dma.hbm_to_vmem [thread:$0]  %s1, 2048, %s29, [#allocation9], 64, 64, 4
    $region9: #{tpu_custom_call.1} parent=1 // pred_fallthru
      _
    // Predicated region
    $region10: #{tpu_custom_call.1} parent=1 // pred_check
      _
    $region11: #{tpu_custom_call.1} parent=1 // pred_check_branch
      %36 = sbr.rel (0) target = $region13
    $region12: #{tpu_custom_call.1} parent=1 // pred_region
      _
    $region13: #{tpu_custom_call.1} parent=1 // pred_fallthru
      _
    // Predicated region
    $region14: #{tpu_custom_call.1} parent=1 // pred_check
      _
    $region15: #{tpu_custom_call.1} parent=1 // pred_check_branch
      %38 = sbr.rel (0) target = $region17
    $region16: #{tpu_custom_call.1} parent=1 // pred_region
      %s40 = ssub.s32 1024, 1024
      %41 = vsyncadd [#allocation9], %s40
      %s42 = sshll.u32 [#allocation10], 4
      %s43 = int_to_ptr.vmem [resolvable:$true] %s42
      %48 = dma.hbm_to_vmem [thread:$0]  %s3, 1024, %s43, [#allocation9], 64, 64, 4
    $region17: #{tpu_custom_call.1} parent=1 // pred_fallthru
      _
    // Predicated region
    $region18: #{tpu_custom_call.1} parent=1 // pred_check
      _
    $region19: #{tpu_custom_call.1} parent=1 // pred_check_branch
      %50 = sbr.rel (0) target = $region21
    $region20: #{tpu_custom_call.1} parent=1 // pred_region
      _
    $region21: #{tpu_custom_call.1} parent=1 // pred_fallthru
      _
    // Predicated region
    $region22: #{tpu_custom_call.1} parent=1 // pred_check
      _
    $region23: #{tpu_custom_call.1} parent=1 // pred_check_branch
      %52 = sbr.rel (0) target = $region25
    $region24: #{tpu_custom_call.1} parent=1 // pred_region
      %53 = dma.done [#allocation6], 128
    $region25: #{tpu_custom_call.1} parent=1 // pred_fallthru
      _
    // Predicated region
    $region26: #{tpu_custom_call.1} parent=1 // pred_check
      _
    $region27: #{tpu_custom_call.1} parent=1 // pred_check_branch
      %55 = sbr.rel (0) target = $region29
    $region28: #{tpu_custom_call.1} parent=1 // pred_region
      %56 = dma.done [#allocation9], 2048
    $region29: #{tpu_custom_call.1} parent=1 // pred_fallthru
      _
    // Predicated region
    $region30: #{tpu_custom_call.1} parent=1 // pred_check
      _
    $region31: #{tpu_custom_call.1} parent=1 // pred_check_branch
      %58 = sbr.rel (0) target = $region33
    $region32: #{tpu_custom_call.1} parent=1 // pred_region
      %59 = dma.done [#allocation9], 1024
    $region33: #{tpu_custom_call.1} parent=1 // pred_fallthru
      _
    %p61 = scmp.eq.s32.totalorder 0, 0
    // Predicated region
    $region34: #{tpu_custom_call.1} parent=1 // pred_check
      %p62 = pneg %p61
    $region35: #{tpu_custom_call.1} parent=1 // pred_check_branch
      %64 = sbr.rel (%p62) target = $region37
    $region36: #{tpu_custom_call.1} parent=1 // pred_region
      %v65 = vld [vmem:[#allocation5] sm:$0xff]
      %v66 = vld [vmem:[#allocation8] sm:$0xf]
      %v67 = vld [vmem:[#allocation8 + $0x4] sm:$0xf]
      %v68 = vld [vmem:[#allocation8 + $0x8] sm:$0xf]
      %v69 = vld [vmem:[#allocation8 + $0xc] sm:$0xf]
      %v70 = vld [vmem:[#allocation8 + $0x10] sm:$0xf]
      %v71 = vld [vmem:[#allocation8 + $0x14] sm:$0xf]
      %v72 = vld [vmem:[#allocation8 + $0x18] sm:$0xf]
      %v73 = vld [vmem:[#allocation8 + $0x1c] sm:$0xf]
      %v74 = vld [vmem:[#allocation8 + $0x20] sm:$0xf]
      %v75 = vld [vmem:[#allocation8 + $0x24] sm:$0xf]
      %v76 = vld [vmem:[#allocation8 + $0x28] sm:$0xf]
      %v77 = vld [vmem:[#allocation8 + $0x2c] sm:$0xf]
      %v78 = vld [vmem:[#allocation8 + $0x30] sm:$0xf]
      %v79 = vld [vmem:[#allocation8 + $0x34] sm:$0xf]
      %v80 = vld [vmem:[#allocation8 + $0x38] sm:$0xf]
      %v81 = vld [vmem:[#allocation8 + $0x3c] sm:$0xf]
      %v82 = vld [vmem:[#allocation8 + $0x40] sm:$0xf]
      %v83 = vld [vmem:[#allocation8 + $0x44] sm:$0xf]
      %v84 = vld [vmem:[#allocation8 + $0x48] sm:$0xf]
      %v85 = vld [vmem:[#allocation8 + $0x4c] sm:$0xf]
      %v86 = vld [vmem:[#allocation8 + $0x50] sm:$0xf]
      %v87 = vld [vmem:[#allocation8 + $0x54] sm:$0xf]
      %v88 = vld [vmem:[#allocation8 + $0x58] sm:$0xf]
      %v89 = vld [vmem:[#allocation8 + $0x5c] sm:$0xf]
      %v90 = vld [vmem:[#allocation8 + $0x60] sm:$0xf]
      %v91 = vld [vmem:[#allocation8 + $0x64] sm:$0xf]
      %v92 = vld [vmem:[#allocation8 + $0x68] sm:$0xf]
      %v93 = vld [vmem:[#allocation8 + $0x6c] sm:$0xf]
      %v94 = vld [vmem:[#allocation8 + $0x70] sm:$0xf]
      %v95 = vld [vmem:[#allocation8 + $0x74] sm:$0xf]
      %v96 = vld [vmem:[#allocation8 + $0x78] sm:$0xf]
      %v97 = vld [vmem:[#allocation8 + $0x7c] sm:$0xf]
      %v98 = vld [vmem:[%s2] sm:$0x1]
      %v100 = vlaneseq
      %v101 = vshrl.u32 %v100, 7
      %v102 = vsub.s32 0, %v101
      %v103 = vrot.slane %v98, %v102
      %v106 = vunpack.c.l.b16 %v65
      %v107 = vunpack.c.h.b16 %v65
      %v108 = vpack.c.b16 %v106, %v106
      %v109 = vpack.c.b16 %v107, %v107
      %v144 = vunpack.c.l.b16 %v66
      %v145 = vunpack.c.l.b16 %v67
      %v146 = vunpack.c.l.b16 %v68
      %v147 = vunpack.c.l.b16 %v69
      %v148 = vunpack.c.l.b16 %v70
      %v149 = vunpack.c.l.b16 %v71
      %v150 = vunpack.c.l.b16 %v72
      %v151 = vunpack.c.l.b16 %v73
      %v152 = vunpack.c.l.b16 %v74
      %v153 = vunpack.c.l.b16 %v75
      %v154 = vunpack.c.l.b16 %v76
      %v155 = vunpack.c.l.b16 %v77
      %v156 = vunpack.c.l.b16 %v78
      %v157 = vunpack.c.l.b16 %v79
      %v158 = vunpack.c.l.b16 %v80
      %v159 = vunpack.c.l.b16 %v81
      %v160 = vunpack.c.l.b16 %v82
      %v161 = vunpack.c.l.b16 %v83
      %v162 = vunpack.c.l.b16 %v84
      %v163 = vunpack.c.l.b16 %v85
      %v164 = vunpack.c.l.b16 %v86
      %v165 = vunpack.c.l.b16 %v87
      %v166 = vunpack.c.l.b16 %v88
      %v167 = vunpack.c.l.b16 %v89
      %v168 = vunpack.c.l.b16 %v90
      %v169 = vunpack.c.l.b16 %v91
      %v170 = vunpack.c.l.b16 %v92
      %v171 = vunpack.c.l.b16 %v93
      %v172 = vunpack.c.l.b16 %v94
      %v173 = vunpack.c.l.b16 %v95
      %v174 = vunpack.c.l.b16 %v96
      %v175 = vunpack.c.l.b16 %v97
      %v176 = vpack.c.b16 %v145, %v144
      %v177 = vpack.c.b16 %v147, %v146
      %v178 = vpack.c.b16 %v149, %v148
      %v179 = vpack.c.b16 %v151, %v150
      %v180 = vpack.c.b16 %v153, %v152
      %v181 = vpack.c.b16 %v155, %v154
      %v182 = vpack.c.b16 %v157, %v156
      %v183 = vpack.c.b16 %v159, %v158
      %v184 = vpack.c.b16 %v161, %v160
      %v185 = vpack.c.b16 %v163, %v162
      %v186 = vpack.c.b16 %v165, %v164
      %v187 = vpack.c.b16 %v167, %v166
      %v188 = vpack.c.b16 %v169, %v168
      %v189 = vpack.c.b16 %v171, %v170
      %v190 = vpack.c.b16 %v173, %v172
      %v191 = vpack.c.b16 %v175, %v174
      %208 = vmatprep.subr.bf16.mxu0 0
      %209 = vmatpush1.bf16.msra.mxu0 %v176
      %210 = vmatprep.subr.bf16.mxu0 0
      %211 = vmatpush1.bf16.msra.mxu0 %v177
      %212 = vmatprep.subr.bf16.mxu0 0
      %213 = vmatpush1.bf16.msra.mxu0 %v178
      %214 = vmatprep.subr.bf16.mxu0 0
      %215 = vmatpush1.bf16.msra.mxu0 %v179
      %216 = vmatprep.subr.bf16.mxu0 0
      %217 = vmatpush1.bf16.msra.mxu0 %v180
      %218 = vmatprep.subr.bf16.mxu0 0
      %219 = vmatpush1.bf16.msra.mxu0 %v181
      %220 = vmatprep.subr.bf16.mxu0 0
      %221 = vmatpush1.bf16.msra.mxu0 %v182
      %222 = vmatprep.subr.bf16.mxu0 0
      %223 = vmatpush1.bf16.msra.mxu0 %v183
      %224 = vmatprep.subr.bf16.mxu0 0
      %225 = vmatpush1.bf16.msra.mxu0 %v184
      %226 = vmatprep.subr.bf16.mxu0 0
      %227 = vmatpush1.bf16.msra.mxu0 %v185
      %228 = vmatprep.subr.bf16.mxu0 0
      %229 = vmatpush1.bf16.msra.mxu0 %v186
      %230 = vmatprep.subr.bf16.mxu0 0
      %231 = vmatpush1.bf16.msra.mxu0 %v187
      %232 = vmatprep.subr.bf16.mxu0 0
      %233 = vmatpush1.bf16.msra.mxu0 %v188
      %234 = vmatprep.subr.bf16.mxu0 0
      %235 = vmatpush1.bf16.msra.mxu0 %v189
      %236 = vmatprep.subr.bf16.mxu0 0
      %237 = vmatpush1.bf16.msra.mxu0 %v190
      %238 = vmatprep.subr.bf16.mxu0 0
      %239 = vmatpush1.bf16.msra.mxu0 %v191
      %240 = vmatprep.mubr.bf16.mxu0 %v109
      %241 = vmatmul.mubr.bf16.gmra.mrb[0].mxu0 %v108
      %v242 = vpop.f32.mrb[0].mxu0
      %v243 = vadd.f32 %v103, %v242
      %v244 = vpop.f32.mrb[0].mxu0
      %v245 = vpop.f32.mrb[0].mxu0
      %v246 = vpop.f32.mrb[0].mxu0
      %247 = vdwg.mxu0
      %v248 = vtanh.pop %v243
      %v249 = vpack.c.bf16 %v248, %v248
      %250 = vst [vmem:[#allocation2] sm:$0xf] %v249
      %vm251 = vcmask 7168
      %252 = vst.msk [vmem:[#allocation3] sm:$0xff] %vm251, -inf
      %253 = vst.msk [vmem:[#allocation4] sm:$0xff] %vm251, 0.0
    $region37: #{tpu_custom_call.1} parent=1 // pred_fallthru
      _
    %v254 = vld [vmem:[#allocation2] sm:$0xf]
    %v255 = vld [vmem:[#allocation10] sm:$0xf]
    %v256 = vld [vmem:[#allocation10 + $0x4] sm:$0xf]
    %v257 = vld [vmem:[#allocation10 + $0x8] sm:$0xf]
    %v258 = vld [vmem:[#allocation10 + $0xc] sm:$0xf]
    %v259 = vld [vmem:[#allocation10 + $0x10] sm:$0xf]
    %v260 = vld [vmem:[#allocation10 + $0x14] sm:$0xf]
    %v261 = vld [vmem:[#allocation10 + $0x18] sm:$0xf]
    %v262 = vld [vmem:[#allocation10 + $0x1c] sm:$0xf]
    %v263 = vld [vmem:[#allocation10 + $0x20] sm:$0xf]
    %v264 = vld [vmem:[#allocation10 + $0x24] sm:$0xf]
    %v265 = vld [vmem:[#allocation10 + $0x28] sm:$0xf]
    %v266 = vld [vmem:[#allocation10 + $0x2c] sm:$0xf]
    %v267 = vld [vmem:[#allocation10 + $0x30] sm:$0xf]
    %v268 = vld [vmem:[#allocation10 + $0x34] sm:$0xf]
    %v269 = vld [vmem:[#allocation10 + $0x38] sm:$0xf]
    %v270 = vld [vmem:[#allocation10 + $0x3c] sm:$0xf]
    %v271 = vld [vmem:[%s4] sm:$0x1]
    %v273 = vlaneseq
    %v274 = vshrl.u32 %v273, 7
    %v275 = vsub.s32 0, %v274
    %v276 = vrot.slane %v271, %v275
    %v294 = vunpack.c.l.b16 %v255
    %v295 = vunpack.c.l.b16 %v256
    %v296 = vunpack.c.l.b16 %v257
    %v297 = vunpack.c.l.b16 %v258
    %v298 = vunpack.c.l.b16 %v259
    %v299 = vunpack.c.l.b16 %v260
    %v300 = vunpack.c.l.b16 %v261
    %v301 = vunpack.c.l.b16 %v262
    %v302 = vunpack.c.l.b16 %v263
    %v303 = vunpack.c.l.b16 %v264
    %v304 = vunpack.c.l.b16 %v265
    %v305 = vunpack.c.l.b16 %v266
    %v306 = vunpack.c.l.b16 %v267
    %v307 = vunpack.c.l.b16 %v268
    %v308 = vunpack.c.l.b16 %v269
    %v309 = vunpack.c.l.b16 %v270
    %v310 = vpack.c.b16 %v295, %v294
    %v311 = vpack.c.b16 %v297, %v296
    %v312 = vpack.c.b16 %v299, %v298
    %v313 = vpack.c.b16 %v301, %v300
    %v314 = vpack.c.b16 %v303, %v302
    %v315 = vpack.c.b16 %v305, %v304
    %v316 = vpack.c.b16 %v307, %v306
    %v317 = vpack.c.b16 %v309, %v308
    %326 = vmatprep.subr.bf16.mxu0 0
    %327 = vmatpush1.bf16.msra.mxu0 %v310
    %328 = vmatprep.subr.bf16.mxu0 0
    %329 = vmatpush1.bf16.msra.mxu0 %v311
    %330 = vmatprep.subr.bf16.mxu0 0
    %331 = vmatpush1.bf16.msra.mxu0 %v312
    %332 = vmatprep.subr.bf16.mxu0 0
    %333 = vmatpush1.bf16.msra.mxu0 %v313
    %334 = vmatprep.subr.bf16.mxu0 0
    %335 = vmatpush1.bf16.msra.mxu0 %v314
    %336 = vmatprep.subr.bf16.mxu0 0
    %337 = vmatpush1.bf16.msra.mxu0 %v315
    %338 = vmatprep.subr.bf16.mxu0 0
    %339 = vmatpush1.bf16.msra.mxu0 %v316
    %340 = vmatprep.subr.bf16.mxu0 0
    %341 = vmatpush1.bf16.msra.mxu0 %v317
    %342 = vmatprep.subr.bf16.mxu0 0
    %343 = vmatpush1.bf16.msra.mxu0 0
    %344 = vmatprep.subr.bf16.mxu0 0
    %345 = vmatpush1.bf16.msra.mxu0 0
    %346 = vmatprep.subr.bf16.mxu0 0
    %347 = vmatpush1.bf16.msra.mxu0 0
    %348 = vmatprep.subr.bf16.mxu0 0
    %349 = vmatpush1.bf16.msra.mxu0 0
    %350 = vmatprep.subr.bf16.mxu0 0
    %351 = vmatpush1.bf16.msra.mxu0 0
    %352 = vmatprep.subr.bf16.mxu0 0
    %353 = vmatpush1.bf16.msra.mxu0 0
    %354 = vmatprep.subr.bf16.mxu0 0
    %355 = vmatpush1.bf16.msra.mxu0 0
    %356 = vmatprep.subr.bf16.mxu0 0
    %357 = vmatpush1.bf16.msra.mxu0 0
    %358 = vmatprep.mubr.bf16.mxu0 0
    %359 = vmatmul.mubr.bf16.gmra.mrb[0].mxu0 %v254
    %v360 = vpop.f32.mrb[0].mxu0
    %v361 = vadd.f32 %v276, %v360
    %v362 = vpop.f32.mrb[0].mxu0
    %v363 = vpop.f32.mrb[0].mxu0
    %v364 = vpop.f32.mrb[0].mxu0
    %365 = vdwg.mxu0
    %v366 = vld [vmem:[#allocation3] sm:$0xff]
    %367 = vmax.xlane.f32.xlu0 %v361
    %v368 = vpop.xlane.xlu0 %367
    %v369 = vmax.f32 %v366, %v368
    %v370 = vsub.f32 %v366, %v369
    %v371 = vmul.f32 %v370, 1.442695
    %v372 = vpow.pop %v371
    %v373 = vld [vmem:[#allocation4] sm:$0xff]
    %v374 = vmul.f32 %v372, %v373
    %376 = vset.pattern.permute.xlu0 0
    %377 = vperm.xlu0 %376, %v369
    %v378 = vpop.permute.xlu0 %377
    %v380 = vsub.f32 %v361, %v378
    %v381 = vmul.f32 %v380, 1.442695
    %v382 = vpow.pop %v381
    %383 = vadd.xlane.f32.xlu0 %v382
    %v384 = vpop.xlane.xlu0 %383
    %v385 = vadd.f32 %v374, %v384
    %vm386 = vcmask 7168
    %387 = vst.msk [vmem:[#allocation4] sm:$0xff] %vm386, %v385
    %388 = vst.msk [vmem:[#allocation3] sm:$0xff] %vm386, %v369
    %s389 = smul.u32 0, 128
    %s390 = sshra.s32 %s389, 7
    %s391 = sand.u32 %s389, 127
    %s392 = scalar_lea.vmem [#allocation11], %s390
    %393 = vst [vmem:[%s392] sm:$0xff] %v361
    // Predicated region
    $region38: #{tpu_custom_call.1} parent=1 // pred_check
      %p394 = pneg %p61
    $region39: #{tpu_custom_call.1} parent=1 // pred_check_branch
      %396 = sbr.rel (%p394) target = $region41
    $region40: #{tpu_custom_call.1} parent=1 // pred_region
      %v397 = vld [vmem:[#allocation3] sm:$0xff]
      %v398 = vld [vmem:[#allocation4] sm:$0xff]
      %v399 = vlog2.pop %v398
      %v400 = vmul.f32 %v399, 0.6931472
      %v401 = vadd.f32 %v397, %v400
      %v402 = vld [vmem:[#allocation11] sm:$0xff]
      %404 = vset.pattern.permute.xlu0 0
      %405 = vperm.xlu0 %404, %v401
      %v406 = vpop.permute.xlu0 %405
      %v408 = vsub.f32 %v402, %v406
      %409 = vst [vmem:[#allocation11] sm:$0xff] %v408
    $region41: #{tpu_custom_call.1} parent=1 // pred_fallthru
      _
    // Predicated region
    $region42: #{tpu_custom_call.1} parent=1 // pred_check
      _
    $region43: #{tpu_custom_call.1} parent=1 // pred_check_branch
      %411 = sbr.rel (0) target = $region45
    $region44: #{tpu_custom_call.1} parent=1 // pred_region
      %s413 = ssub.s32 128, 128
      %414 = vsyncadd [#allocation7], %s413
      %s416 = sshll.u32 [#allocation11], 4
      %s417 = int_to_ptr.vmem [resolvable:$true] %s416
      %419 = dma.vmem_to_hbm [thread:$0]  %s417, 128, %s5, [#allocation7]
    $region45: #{tpu_custom_call.1} parent=1 // pred_fallthru
      _
    // Predicated region
    $region46: #{tpu_custom_call.1} parent=1 // pred_check
      _
    $region47: #{tpu_custom_call.1} parent=1 // pred_check_branch
      %421 = sbr.rel (0) target = $region49
    $region48: #{tpu_custom_call.1} parent=1 // pred_region
      %422 = dma.done [#allocation7], 128
    $region49: #{tpu_custom_call.1} parent=1 // pred_fallthru
      _
    %423 = vsyncpa [#allocation6], 1
    %424 = vsyncpa [#allocation9], 1
    %425 = vsyncpa [#allocation7], 1

</llo_original>
